<compile_context>
chip_gen: v7x
topology: tpu7x:2x2x1
jax: 0.10.0
libtpu: 0.0.40
codegen_flags: <defaults>
</compile_context>

<pallas_src>
import functools
import math

import jax
import jax.numpy as jnp
from jax.experimental import pallas as pl
from jax.experimental.pallas import tpu as pltpu

_MIB = 1024 * 1024


def _sublane(dtype):
    # sublane packing: f32 -> 8, bf16/f16 -> 16, int8/fp8 -> 32
    return {1: 32, 2: 16, 4: 8}.get(jnp.dtype(dtype).itemsize, 8)


def _round_up(x, m):
    return ((x + m - 1) // m) * m


def _tpu_config():
    """Return (vmem_capacity_bytes, tensorcores_per_chip) with conservative fallbacks."""
    vmem = 128 * _MIB
    cores = 1
    try:
        info = pltpu.get_tpu_info()
        vmem = int(getattr(info, "vmem_capacity_bytes", vmem))
        for attr in ("num_tensorcores", "num_cores", "core_count", "cores_per_chip"):
            v = getattr(info, attr, None)
            if v:
                cores = int(v)
                break
    except Exception:
        pass
    if cores == 1 and vmem <= 64 * _MIB:
        cores = 2  # v7x: 64 MiB VMEM per TC, 2 TCs per chip
    return vmem, cores


def _budgets():
    """(block buffer budget, vmem_limit_bytes, cores) — generation aware."""
    vmem, cores = _tpu_config()
    if vmem <= 64 * _MIB:                      # v7x
        return 12 * _MIB, 36 * _MIB, cores
    return 16 * _MIB, 48 * _MIB, cores         # v5e / v6e (don't grow; kernel is HBM-bound)


# ---------------------------------------------------------------------------
# channels_last kernels: normalize over the last (lane) axis
# ---------------------------------------------------------------------------
def _ln_cl_kernel(x_ref, w_ref, b_ref, o_ref, *, eps):
    # x_ref: (row_tile, C), C a multiple of 128 (or the full dim). Lane reduction over C.
    x = x_ref[...].astype(jnp.float32)
    u = jnp.mean(x, axis=-1, keepdims=True)
    xc = x - u
    s = jnp.mean(xc * xc, axis=-1, keepdims=True)          # biased variance (two-pass)
    a = jax.lax.rsqrt(s + eps)                              # (tile, 1)
    w = w_ref[...].astype(jnp.float32)                      # (1, C)
    b = b_ref[...].astype(jnp.float32)
    o_ref[...] = ((xc * a) * w + b).astype(o_ref.dtype)     # fused normalize + affine


def _ln_cl_folded_kernel(x_ref, w_ref, b_ref, o_ref, *, eps, C, k):
    # x_ref: (row_tile, k*C) — k original rows folded onto the lane axis so the lane width
    # is a multiple of 128 (lane-dense loads/stores). Per-segment (length-C) stats are
    # computed with a 0/1 membership-matrix matmul on the otherwise idle MXU.
    kc = k * C
    x = x_ref[...].astype(jnp.float32)                      # (tile, kc)
    # membership matrix m: (kc, k), m[i, j] = 1 iff lane i belongs to segment j
    seg = jax.lax.broadcasted_iota(jnp.int32, (kc, k), 0) // C
    col = jax.lax.broadcasted_iota(jnp.int32, (kc, k), 1)
    m = (seg == col).astype(jnp.float32)
    # transposed membership built directly (avoids an in-kernel transpose)
    seg_t = jax.lax.broadcasted_iota(jnp.int32, (k, kc), 1) // C
    row_t = jax.lax.broadcasted_iota(jnp.int32, (k, kc), 0)
    mt = (seg_t == row_t).astype(jnp.float32)

    hp = jax.lax.Precision.HIGHEST
    inv_c = jnp.float32(1.0 / C)
    u_seg = jnp.dot(x, m, preferred_element_type=jnp.float32, precision=hp) * inv_c   # (tile,k)
    u = jnp.dot(u_seg, mt, preferred_element_type=jnp.float32, precision=hp)          # (tile,kc)
    xc = x - u
    s_seg = jnp.dot(xc * xc, m, preferred_element_type=jnp.float32, precision=hp) * inv_c
    a_seg = jax.lax.rsqrt(s_seg + eps)                                                 # (tile,k)
    a = jnp.dot(a_seg, mt, preferred_element_type=jnp.float32, precision=hp)           # (tile,kc)
    w = w_ref[...].astype(jnp.float32)                       # (1, kc) — weight tiled k times
    b = b_ref[...].astype(jnp.float32)
    o_ref[...] = ((xc * a) * w + b).astype(o_ref.dtype)


def _row_tile(rows, width, dtype, budget, cores):
    itemsize = jnp.dtype(dtype).itemsize
    sub = _sublane(dtype)
    # VMEM per row: double-buffered in + out blocks + ~3 full-tile f32 temporaries.
    per_row = width * (2 * 2 * itemsize + 3 * 4)
    tile = max(1, budget // per_row)
    tile = min(tile, 1024, rows)                  # 512-1024 rows already ~85-86% of roofline
    if rows <= sub:
        return rows                               # full-extent block is always legal
    tile = max(sub, (tile // sub) * sub)          # align to sublane packing
    if cores >= 2 and rows >= 4 * sub:
        # >= 4 blocks on the parallel axis -> >= 2 pipelined iterations per TensorCore (v7x)
        tile = min(tile, max(sub, _round_up(pl.cdiv(rows, 4), sub)))
    return tile


def _ln_cl_call(x, w, b, *, eps, C, k, budget, vmem_limit, cores):
    rows, width = x.shape
    itemsize = jnp.dtype(x.dtype).itemsize
    tile = _row_tile(rows, width, x.dtype, budget, cores)
    grid = (pl.cdiv(rows, tile),)                 # ragged last block masked by Pallas

    if k == 1:
        kernel = functools.partial(_ln_cl_kernel, eps=eps)
    else:
        kernel = functools.partial(_ln_cl_folded_kernel, eps=eps, C=C, k=k)

    cost = pl.CostEstimate(
        flops=9 * rows * width,
        transcendentals=rows * k,
        bytes_accessed=2 * rows * width * itemsize + 2 * width * 4,
    )
    return pl.pallas_call(
        kernel,
        out_shape=jax.ShapeDtypeStruct((rows, width), x.dtype),
        grid_spec=pltpu.PrefetchScalarGridSpec(
            num_scalar_prefetch=0,
            grid=grid,
            in_specs=[
                pl.BlockSpec((tile, width), lambda i: (i, 0)),
                pl.BlockSpec((1, width), lambda i: (0, 0)),
                pl.BlockSpec((1, width), lambda i: (0, 0)),
            ],
            out_specs=pl.BlockSpec((tile, width), lambda i: (i, 0)),
        ),
        compiler_params=pltpu.CompilerParams(
            dimension_semantics=("parallel",),
            vmem_limit_bytes=vmem_limit,
        ),
        cost_estimate=cost,
    )(x, w, b)


def _layernorm_channels_last_2d(x2d, weight, bias, eps):
    rows, C = x2d.shape
    budget, vmem_limit, cores = _budgets()

    # Fold k consecutive rows onto the lane axis so lane width is a multiple of 128
    # (ConvNeXt C = 4/96/192 -> lane-dense stores instead of masked vst.msk).
    k = 128 // math.gcd(C, 128)
    if k > 1 and rows % k == 0 and k * C <= 512:
        xk = x2d.reshape(rows // k, k * C)                   # free reshape
        wk = jnp.tile(weight.reshape(-1), k).reshape(1, k * C)
        bk = jnp.tile(bias.reshape(-1), k).reshape(1, k * C)
        out = _ln_cl_call(xk, wk, bk, eps=eps, C=C, k=k,
                          budget=budget, vmem_limit=vmem_limit, cores=cores)
        return out.reshape(rows, C)

    w2 = weight.reshape(1, C)
    b2 = bias.reshape(1, C)
    return _ln_cl_call(x2d, w2, b2, eps=eps, C=C, k=1,
                       budget=budget, vmem_limit=vmem_limit, cores=cores)


# ---------------------------------------------------------------------------
# channels_first: normalize over C (sublane axis); H*W stays on the lane axis
# ---------------------------------------------------------------------------
def _ln_cf_kernel(x_ref, w_ref, b_ref, o_ref, *, eps):
    # x_ref: (C, hw_tile) — leading batch dim squeezed away by the BlockSpec.
    x = x_ref[...].astype(jnp.float32)
    u = jnp.mean(x, axis=0, keepdims=True)                   # (1, hw_tile)
    xc = x - u
    s = jnp.mean(xc * xc, axis=0, keepdims=True)             # biased variance
    a = jax.lax.rsqrt(s + eps)                               # (1, hw_tile)
    w = w_ref[...].astype(jnp.float32)                       # (C, 1)
    b = b_ref[...].astype(jnp.float32)
    o_ref[...] = ((xc * a) * w + b).astype(o_ref.dtype)


def _layernorm_channels_first(x, weight, bias, eps):
    N, C, H, W = x.shape
    HW = H * W
    x3 = x.reshape(N, C, HW)                                 # free: no data movement
    itemsize = jnp.dtype(x.dtype).itemsize
    budget, vmem_limit, cores = _budgets()

    per_col = C * (2 * 2 * itemsize + 3 * 4)
    tile_hw = max(1, budget // per_col)
    tile_hw = min(tile_hw, 8192)
    if tile_hw >= HW or HW < 128:
        tile_hw = HW                                         # full-dim block (always legal)
    else:
        tile_hw = max(128, (tile_hw // 128) * 128)           # lane-aligned

    # Keep enough grid steps so the software pipeline (and both v7x cores) can overlap DMA.
    min_steps = 8 if cores >= 2 else 4
    if N * pl.cdiv(HW, tile_hw) < min_steps:
        blocks_per_n = pl.cdiv(min_steps, N)
        if HW >= blocks_per_n * 128:
            tile_hw = min(tile_hw, max(128, _round_up(pl.cdiv(HW, blocks_per_n), 128)))

    grid = (N, pl.cdiv(HW, tile_hw))
    w2 = weight.reshape(C, 1)
    b2 = bias.reshape(C, 1)

    cost = pl.CostEstimate(
        flops=9 * N * C * HW,
        transcendentals=N * HW,
        bytes_accessed=2 * N * C * HW * itemsize + 2 * C * 4,
    )

    out = pl.pallas_call(
        functools.partial(_ln_cf_kernel, eps=eps),
        out_shape=jax.ShapeDtypeStruct((N, C, HW), x.dtype),
        grid_spec=pltpu.PrefetchScalarGridSpec(
            num_scalar_prefetch=0,
            grid=grid,
            in_specs=[
                pl.BlockSpec((None, C, tile_hw), lambda n, h: (n, 0, h)),  # squeezed N dim
                pl.BlockSpec((C, 1), lambda n, h: (0, 0)),
                pl.BlockSpec((C, 1), lambda n, h: (0, 0)),
            ],
            out_specs=pl.BlockSpec((None, C, tile_hw), lambda n, h: (n, 0, h)),
        ),
        compiler_params=pltpu.CompilerParams(
            dimension_semantics=("parallel", "parallel"),
            vmem_limit_bytes=vmem_limit,
        ),
        cost_estimate=cost,
    )(x3, w2, b2)
    return out.reshape(N, C, H, W)


# ---------------------------------------------------------------------------
# Public wrapper matching the PyTorch module forward
# ---------------------------------------------------------------------------
def layer_norm(x, weight, bias, eps=1e-6, data_format="channels_last"):
    """channels_last : x is (..., C),     normalize over the last axis.
       channels_first: x is (N, C, H, W), normalize over axis 1."""
    if data_format not in ("channels_last", "channels_first"):
        raise NotImplementedError
    if data_format == "channels_last":
        C = x.shape[-1]
        lead = x.shape[:-1]
        y2d = _layernorm_channels_last_2d(x.reshape(-1, C), weight, bias, eps)
        return y2d.reshape(*lead, C)
    else:
        return _layernorm_channels_first(x, weight, bias, eps)


def _ref_layer_norm(x, weight, bias, eps, data_format):
    if data_format == "channels_last":
        u = jnp.mean(x, axis=-1, keepdims=True)
        s = jnp.mean((x - u) ** 2, axis=-1, keepdims=True)
        return (x - u) / jnp.sqrt(s + eps) * weight + bias
    else:
        u = jnp.mean(x, axis=1, keepdims=True)
        s = jnp.mean((x - u) ** 2, axis=1, keepdims=True)
        xn = (x - u) / jnp.sqrt(s + eps)
        return weight[None, :, None, None] * xn + bias[None, :, None, None]


if __name__ == "__main__":
    key = jax.random.PRNGKey(0)
    k1, k2, k3, k4, k5, k6 = jax.random.split(key, 6)
    eps = 1e-6

    # Parameters per nn.Module.__init__ (ones / zeros), slightly perturbed.
    C = 4
    w4 = jax.random.normal(k3, (C,), dtype=jnp.float32) * 0.1 + 1.0
    b4 = jax.random.normal(k4, (C,), dtype=jnp.float32) * 0.1

    # channels_first input, NCHW.
    x_cf = jax.random.normal(k1, (2, C, 16, 16), dtype=jnp.float32)
    y_cf = layer_norm(x_cf, w4, b4, eps=eps, data_format="channels_first")

    # channels_last input, NHWC (C=4 -> folded lane-dense path, k=32).
    x_cl = jax.random.normal(k2, (2, 16, 16, C), dtype=jnp.float32)
    y_cl = layer_norm(x_cl, w4, b4, eps=eps, data_format="channels_last")

    # channels_last, ConvNeXt stage width C=96 (folded k=4 -> 384 lanes).
    C96 = 96
    w96 = jax.random.normal(k5, (C96,), dtype=jnp.float32) * 0.1 + 1.0
    b96 = jax.random.normal(k6, (C96,), dtype=jnp.float32) * 0.1
    x96 = jax.random.normal(k1, (2, 8, 8, C96), dtype=jnp.float32)
    y96 = layer_norm(x96, w96, b96, eps=eps, data_format="channels_last")

    # channels_last, lane-aligned C=128 (plain, non-folded path).
    C128 = 128
    w128 = jnp.ones((C128,), dtype=jnp.float32)
    b128 = jnp.zeros((C128,), dtype=jnp.float32)
    x128 = jax.random.normal(k2, (2, 4, 4, C128), dtype=jnp.float32)
    y128 = layer_norm(x128, w128, b128, eps=eps, data_format="channels_last")

    jax.block_until_ready((y_cf, y_cl, y96, y128))

    assert jnp.allclose(y_cf, _ref_layer_norm(x_cf, w4, b4, eps, "channels_first"),
                        atol=1e-4, rtol=1e-4)
    assert jnp.allclose(y_cl, _ref_layer_norm(x_cl, w4, b4, eps, "channels_last"),
                        atol=1e-4, rtol=1e-4)
    assert jnp.allclose(y96, _ref_layer_norm(x96, w96, b96, eps, "channels_last"),
                        atol=1e-4, rtol=1e-4)
    assert jnp.allclose(y128, _ref_layer_norm(x128, w128, b128, eps, "channels_last"),
                        atol=1e-4, rtol=1e-4)

    print("KERNEL_OK")
</pallas_src>

<mosaic_0001>
module attributes {stable_mosaic.version = 11 : i64} {
  func.func @_ln_cf_kernel(%arg0: i32, %arg1: i32, %arg2: memref<1x4x128xf32, #tpu.memory_space<vmem>>, %arg3: memref<4x1xf32, #tpu.memory_space<vmem>>, %arg4: memref<4x1xf32, #tpu.memory_space<vmem>>, %arg5: memref<1x4x128xf32, #tpu.memory_space<vmem>>) attributes {dimension_semantics = [#tpu.dimension_semantics<parallel>, #tpu.dimension_semantics<parallel>], iteration_bounds = array<i64: 2, 2>, scalar_prefetch = 0 : i64, scratch_operands = 0 : i64, tpu.core_type = #tpu.core_type<tc>, window_params = [{transform_indices = @transform_0, window_bounds = array<i64: 1, 4, 128>}, {pipeline_mode = #tpu.pipeline_mode<synchronous>, transform_indices = @transform_1, window_bounds = array<i64: 4, 1>}, {pipeline_mode = #tpu.pipeline_mode<synchronous>, transform_indices = @transform_2, window_bounds = array<i64: 4, 1>}, {transform_indices = @transform_3, window_bounds = array<i64: 1, 4, 128>}]} {
    %c0 = arith.constant 0 : index
    %c0_0 = arith.constant 0 : index
    %c0_1 = arith.constant 0 : index
    %0 = vector.load %arg2[%c0, %c0_0, %c0_1] : memref<1x4x128xf32, #tpu.memory_space<vmem>>, vector<1x4x128xf32>
    %1 = vector.shape_cast %0 : vector<1x4x128xf32> to vector<4x128xf32>
    %cst = arith.constant dense<0.000000e+00> : vector<128xf32>
    %2 = vector.multi_reduction <add>, %1, %cst [0] : vector<4x128xf32> to vector<128xf32>
    %3 = vector.shape_cast %2 : vector<128xf32> to vector<1x128xf32>
    %cst_2 = arith.constant 4.000000e+00 : f32
    %4 = vector.broadcast %cst_2 : f32 to vector<1x128xf32>
    %5 = arith.divf %3, %4 : vector<1x128xf32>
    %6 = vector.broadcast %5 : vector<1x128xf32> to vector<4x128xf32>
    %7 = arith.subf %1, %6 : vector<4x128xf32>
    %8 = arith.mulf %7, %7 : vector<4x128xf32>
    %cst_3 = arith.constant dense<0.000000e+00> : vector<128xf32>
    %9 = vector.multi_reduction <add>, %8, %cst_3 [0] : vector<4x128xf32> to vector<128xf32>
    %10 = vector.shape_cast %9 : vector<128xf32> to vector<1x128xf32>
    %cst_4 = arith.constant 4.000000e+00 : f32
    %11 = vector.broadcast %cst_4 : f32 to vector<1x128xf32>
    %12 = arith.divf %10, %11 : vector<1x128xf32>
    %cst_5 = arith.constant 9.99999997E-7 : f32
    %13 = vector.broadcast %cst_5 : f32 to vector<1x128xf32>
    %14 = arith.addf %12, %13 : vector<1x128xf32>
    %15 = math.rsqrt %14 : vector<1x128xf32>
    %c0_6 = arith.constant 0 : index
    %c0_7 = arith.constant 0 : index
    %16 = vector.load %arg3[%c0_6, %c0_7] : memref<4x1xf32, #tpu.memory_space<vmem>>, vector<4x1xf32>
    %c0_8 = arith.constant 0 : index
    %c0_9 = arith.constant 0 : index
    %17 = vector.load %arg4[%c0_8, %c0_9] : memref<4x1xf32, #tpu.memory_space<vmem>>, vector<4x1xf32>
    %18 = vector.broadcast %15 : vector<1x128xf32> to vector<4x128xf32>
    %19 = arith.mulf %7, %18 : vector<4x128xf32>
    %20 = vector.broadcast %16 : vector<4x1xf32> to vector<4x128xf32>
    %21 = arith.mulf %19, %20 : vector<4x128xf32>
    %22 = vector.broadcast %17 : vector<4x1xf32> to vector<4x128xf32>
    %23 = arith.addf %21, %22 : vector<4x128xf32>
    %c0_10 = arith.constant 0 : index
    %c0_11 = arith.constant 0 : index
    %c0_12 = arith.constant 0 : index
    %24 = vector.load %arg5[%c0_10, %c0_11, %c0_12] : memref<1x4x128xf32, #tpu.memory_space<vmem>>, vector<1x4x128xf32>
    %25 = vector.shape_cast %24 : vector<1x4x128xf32> to vector<4x128xf32>
    %26 = vector.shape_cast %23 : vector<4x128xf32> to vector<1x4x128xf32>
    tpu.vector_store %arg5[%c0_10, %c0_11, %c0_12], %26 {strides = array<i32>} : memref<1x4x128xf32, #tpu.memory_space<vmem>>, vector<1x4x128xf32>,
    return
  }
  func.func @transform_0(%arg0: i32, %arg1: i32) -> (i32, i32, i32) {
    %c0_i32 = arith.constant 0 : i32
    %c0_i32_0 = arith.constant 0 : i32
    return %arg0, %c0_i32, %arg1 : i32, i32, i32
  }
  func.func @transform_1(%arg0: i32, %arg1: i32) -> (i32, i32) {
    %c0_i32 = arith.constant 0 : i32
    %c0_i32_0 = arith.constant 0 : i32
    %c0_i32_1 = arith.constant 0 : i32
    return %c0_i32, %c0_i32_0 : i32, i32
  }
  func.func @transform_2(%arg0: i32, %arg1: i32) -> (i32, i32) {
    %c0_i32 = arith.constant 0 : i32
    %c0_i32_0 = arith.constant 0 : i32
    %c0_i32_1 = arith.constant 0 : i32
    return %c0_i32, %c0_i32_0 : i32, i32
  }
  func.func @transform_3(%arg0: i32, %arg1: i32) -> (i32, i32, i32) {
    %c0_i32 = arith.constant 0 : i32
    %c0_i32_0 = arith.constant 0 : i32
    return %arg0, %c0_i32, %arg1 : i32, i32, i32
  }
}

</mosaic_0001>

<llo_original>
// kernel: tpu_custom_call.1
$region0: #{tpu_custom_call.1}
  #allocation0 [shape = 'u32[]', space=smem, size = 0x4, offset = 0x4, fixed_abs, tag = 'smem constant byte address 0x4 - core index']
  #allocation1 [shape = 'u32[144,128]{1,0:T(1,128)}', space=vmem, size = 0x12000, scoped, tag = 'internal scratch']
  %s0 = inlined_call_operand.hbm [shape: f32[2,4,256], index: 0, kind: input, shape index: {}]
  %s1 = inlined_call_operand.vmem [shape: f32[4,1], index: 1, kind: input, shape index: {}]
  %s2 = inlined_call_operand.vmem [shape: f32[4,1], index: 2, kind: input, shape index: {}]
  %s3 = inlined_call_operand.hbm [shape: f32[2,4,256], index: 3, kind: output, shape index: {}]
  %s4 = sld [smem:[#allocation0]]
  $region49: #{tpu_custom_call.1} parent=0
    _
  %s6 = ssub.s32 1, %s4
  %s7 = scalar_select 0, %s6, %s4
  $region1: #{tpu_custom_call.1} parent=0
    #allocation2 [shape = 'u8[4096]{0}', space=vmem, size = 0x1000, scoped, tag = 'input window, operand 0']
    #allocation3 [shape = 's32[2]{0}', space=sflag, size = 0x8, scoped, tag = 'scoped memory for tpu_custom_call.1']
    #allocation4 [shape = 's32[2]{0}', space=sflag, size = 0x8, scoped, tag = 'scoped memory for tpu_custom_call.1']
    #allocation5 [shape = 'u8[4096]{0}', space=vmem, size = 0x1000, scoped, tag = 'output window, operand 0']
    %8 = vsyncpa [#allocation3], 0
    %s9 = scalar_lea.sflag [#allocation3], 1
    %10 = vsyncpa %s9, 0
    %11 = vsyncpa [#allocation4], 0
    %s12 = scalar_lea.sflag [#allocation4], 1
    %13 = vsyncpa %s12, 0
    loop: start=0, step=1, limit=6
    $region2: #{tpu_custom_call.1} parent=1 // loop_pre_header
      _
    $region3: #{tpu_custom_call.1} parent=1 // loop_header
      %s15 = sphi 0, %s19
      %p16 = scmp.ge.s32.totalorder %s15, 6
      %s22 = sphi 0, %s34
      %s23 = sphi 0, %s30
      %s24 = sphi 0, %s22
      %s25 = sphi 0, %s23
      %s26 = sphi 0, %s24
      %s27 = sphi 0, %s25
      %s39 = sphi 0, %s41
      %s42 = sphi 0, %s39
      %s43 = sphi 0, %s42
      %s59 = sphi 0, %s43
      %s63 = sphi 0, %s63
      %s65 = sphi 0, %s63
      %s66 = sphi 0, %s65
      %s80 = sphi 0, %s66
      %s84 = sphi 0, %s84
      %s86 = sphi 0, %s84
      %s87 = sphi 0, %s86
      %s101 = sphi 0, %s87
      %s109 = sphi 0, %s111
      %s112 = sphi 0, %s109
      %s113 = sphi 0, %s112
      %s129 = sphi 0, %s113
    $region4: #{tpu_custom_call.1} parent=1 // loop_header_branch
      %18 = sbr.rel (%p16) target = $region8
    $region5: #{tpu_custom_call.1} parent=1 // loop_body
      %s20 = ssub.s32 %s15, 1
      %s21 = ssub.s32 %s15, 2
      %s28 = sadd.s32 1, %s23
      %p29 = scmp.ge.s32.totalorder %s28, 2
      %s30 = scalar_select %p29, 0, %s28
      %s31 = sadd.s32 1, %s22
      %s32 = scalar_select %p29, %s31, %s22
      %p33 = scmp.ge.s32.totalorder %s32, 2
      %s34 = scalar_select %p33, 0, %s32
      %s35 = ssub.s32 %s22, %s34
      %s36 = ssub.s32 %s23, %s30
      %s37 = sor.u32 %s35, %s36
      %p38 = scmp.eq.s32.totalorder %s37, 0
      %s40 = sadd.s32 %s39, 1
      %s41 = scalar_select %p38, %s39, %s40
      %p44 = pneg %p38
      %p45 = scmp.eq.s32.totalorder %s15, 3
      %p46 = por %p44, %p45
      %p47 = scmp.ne.s32.totalorder %s39, %s42
      %p48 = scmp.eq.s32.totalorder %s15, 0
      %p49 = por %p47, %p48
      %p50 = scmp.ne.s32.totalorder %s39, %s42
      %p51 = scmp.eq.s32.totalorder %s20, 3
      %p52 = por %p50, %p51
      %p53 = scmp.ne.s32.totalorder %s42, %s43
      %p54 = scmp.eq.s32.totalorder %s20, 0
      %p55 = por %p53, %p54
      %p56 = scmp.ne.s32.totalorder %s42, %s43
      %p57 = scmp.eq.s32.totalorder %s21, 3
      %p58 = por %p56, %p57
      %p60 = scmp.ne.s32.totalorder %s43, %s59
      %p61 = scmp.eq.s32.totalorder %s21, 0
      %p62 = por %p60, %p61
      %s64 = sadd.s32 %s63, 1
      %p67 = scmp.eq.s32.totalorder %s15, 3
      %p68 = scmp.ne.s32.totalorder %s63, %s65
      %p69 = scmp.eq.s32.totalorder %s15, 0
      %p70 = por %p68, %p69
      %p71 = scmp.ne.s32.totalorder %s63, %s65
      %p72 = scmp.eq.s32.totalorder %s20, 3
      %p73 = por %p71, %p72
      %p74 = scmp.ne.s32.totalorder %s65, %s66
      %p75 = scmp.eq.s32.totalorder %s20, 0
      %p76 = por %p74, %p75
      %p77 = scmp.ne.s32.totalorder %s65, %s66
      %p78 = scmp.eq.s32.totalorder %s21, 3
      %p79 = por %p77, %p78
      %p81 = scmp.ne.s32.totalorder %s66, %s80
      %p82 = scmp.eq.s32.totalorder %s21, 0
      %p83 = por %p81, %p82
      %s85 = sadd.s32 %s84, 1
      %p88 = scmp.eq.s32.totalorder %s15, 3
      %p89 = scmp.ne.s32.totalorder %s84, %s86
      %p90 = scmp.eq.s32.totalorder %s15, 0
      %p91 = por %p89, %p90
      %p92 = scmp.ne.s32.totalorder %s84, %s86
      %p93 = scmp.eq.s32.totalorder %s20, 3
      %p94 = por %p92, %p93
      %p95 = scmp.ne.s32.totalorder %s86, %s87
      %p96 = scmp.eq.s32.totalorder %s20, 0
      %p97 = por %p95, %p96
      %p98 = scmp.ne.s32.totalorder %s86, %s87
      %p99 = scmp.eq.s32.totalorder %s21, 3
      %p100 = por %p98, %p99
      %p102 = scmp.ne.s32.totalorder %s87, %s101
      %p103 = scmp.eq.s32.totalorder %s21, 0
      %p104 = por %p102, %p103
      %s105 = ssub.s32 %s22, %s34
      %s106 = ssub.s32 %s23, %s30
      %s107 = sor.u32 %s105, %s106
      %p108 = scmp.eq.s32.totalorder %s107, 0
      %s110 = sadd.s32 %s109, 1
      %s111 = scalar_select %p108, %s109, %s110
      %p114 = pneg %p108
      %p115 = scmp.eq.s32.totalorder %s15, 3
      %p116 = por %p114, %p115
      %p117 = scmp.ne.s32.totalorder %s109, %s112
      %p118 = scmp.eq.s32.totalorder %s15, 0
      %p119 = por %p117, %p118
      %p120 = scmp.ne.s32.totalorder %s109, %s112
      %p121 = scmp.eq.s32.totalorder %s20, 3
      %p122 = por %p120, %p121
      %p123 = scmp.ne.s32.totalorder %s112, %s113
      %p124 = scmp.eq.s32.totalorder %s20, 0
      %p125 = por %p123, %p124
      %p126 = scmp.ne.s32.totalorder %s112, %s113
      %p127 = scmp.eq.s32.totalorder %s21, 3
      %p128 = por %p126, %p127
      %p130 = scmp.ne.s32.totalorder %s113, %s129
      %p131 = scmp.eq.s32.totalorder %s21, 0
      %p132 = por %p130, %p131
      %p133 = scmp.le.s32.totalorder 1, %s15
      %p134 = scmp.lt.s32.totalorder %s15, 5
      %p135 = pnand %p133, %p134
      %p136 = pneg %p135
      // Predicated region
      $region9: #{tpu_custom_call.1} parent=5 // pred_check
        _
      $region10: #{tpu_custom_call.1} parent=5 // pred_check_branch
        %138 = sbr.rel (%p135) target = $region12
      $region11: #{tpu_custom_call.1} parent=5 // pred_region
        %s139 = ssub.s32 %s15, 1
        // Predicated region
        $region13: #{tpu_custom_call.1} parent=11 // pred_check
          %p140 = pneg %p76
        $region14: #{tpu_custom_call.1} parent=11 // pred_check_branch
          %142 = sbr.rel (%p140) target = $region16
        $region15: #{tpu_custom_call.1} parent=11 // pred_region
          _
        $region16: #{tpu_custom_call.1} parent=11 // pred_fallthru
          _
        // Predicated region
        $region17: #{tpu_custom_call.1} parent=11 // pred_check
          %p143 = pneg %p97
        $region18: #{tpu_custom_call.1} parent=11 // pred_check_branch
          %145 = sbr.rel (%p143) target = $region20
        $region19: #{tpu_custom_call.1} parent=11 // pred_region
          _
        $region20: #{tpu_custom_call.1} parent=11 // pred_fallthru
          _
      $region12: #{tpu_custom_call.1} parent=5 // pred_fallthru
        _
      %p146 = scmp.lt.s32.totalorder %s15, 4
      // Predicated region
      $region21: #{tpu_custom_call.1} parent=5 // pred_check
        %p147 = pneg %p146
      $region22: #{tpu_custom_call.1} parent=5 // pred_check_branch
        %149 = sbr.rel (%p147) target = $region24
      $region23: #{tpu_custom_call.1} parent=5 // pred_region
        // Predicated region
        $region25: #{tpu_custom_call.1} parent=23 // pred_check
          %p150 = pneg %p49
        $region26: #{tpu_custom_call.1} parent=23 // pred_check_branch
          %152 = sbr.rel (%p150) target = $region28
        $region27: #{tpu_custom_call.1} parent=23 // pred_region
          %s153 = sand.u32 %s39, 1
          %s154 = scalar_lea.sflag [#allocation3], %s153
          %s155 = sand.u32 %s39, 1
          %s156 = smul.addr %s155, 4
          %s157 = scalar_lea.vmem [#allocation2], %s156
          %s159 = ssub.s32 64, 64
          %160 = vsyncadd %s154, %s159
          %s161 = smul.addr %s22, 2
          %s162 = sadd.s32 %s23, %s161
          %s163 = smul.addr %s162, 64
          %s164 = scalar_lea.hbm %s0, %s163
          %s166 = sshll.u32 %s157, 4
          %s167 = int_to_ptr.vmem [resolvable:$true] %s166
          %169 = dma.hbm_to_vmem [thread:$0]  %s164, 64, %s167, %s154
        $region28: #{tpu_custom_call.1} parent=23 // pred_fallthru
          _
      $region24: #{tpu_custom_call.1} parent=5 // pred_fallthru
        _
      %p170 = scmp.le.s32.totalorder 1, %s15
      %p171 = scmp.lt.s32.totalorder %s15, 5
      %p172 = pnand %p170, %p171
      %p173 = pneg %p172
      // Predicated region
      $region29: #{tpu_custom_call.1} parent=5 // pred_check
        _
      $region30: #{tpu_custom_call.1} parent=5 // pred_check_branch
        %175 = sbr.rel (%p172) target = $region32
      $region31: #{tpu_custom_call.1} parent=5 // pred_region
        %s176 = ssub.s32 %s15, 1
        %s177 = sand.u32 %s42, 1
        %s178 = scalar_lea.sflag [#allocation3], %s177
        %s179 = sand.u32 %s42, 1
        %s180 = smul.addr %s179, 4
        %s181 = scalar_lea.vmem [#allocation2], %s180
        // Predicated region
        $region33: #{tpu_custom_call.1} parent=31 // pred_check
          %p182 = pneg %p55
        $region34: #{tpu_custom_call.1} parent=31 // pred_check_branch
          %184 = sbr.rel (%p182) target = $region36
        $region35: #{tpu_custom_call.1} parent=31 // pred_region
          %185 = dma.done %s178, 64
        $region36: #{tpu_custom_call.1} parent=31 // pred_fallthru
          _
        %s186 = sand.u32 %s42, 1
        %s187 = scalar_lea.sflag [#allocation3], %s186
        %s188 = sand.u32 %s42, 1
        %s189 = smul.addr %s188, 4
        %s190 = scalar_lea.vmem [#allocation2], %s189
        %p191 = pneg %p55
        %p192 = pneg %p52
        %p193 = pneg %p76
        %p194 = pneg %p73
        %p195 = pneg %p97
        %p196 = pneg %p94
        %p197 = pneg %p125
        %p198 = pneg %p122
        %s199 = sand.u32 %s112, 1
        %s200 = scalar_lea.sflag [#allocation4], %s199
        %s201 = sand.u32 %s112, 1
        %s202 = smul.addr %s201, 4
        %s203 = scalar_lea.vmem [#allocation5], %s202
        %v204 = vld [vmem:[%s181] sm:$0xf]
        %vm205 = vcmask 1043456
        %v206 = vsel %vm205, %v204, 0.0
        %v207 = vrot.slane %v206, 4
        %v208 = vadd.f32 %v206, %v207
        %v209 = vrot.slane %v208, 2
        %v210 = vadd.f32 %v208, %v209
        %v211 = vrot.slane %v210, 1
        %v212 = vadd.f32 %v210, %v211
        %v213 = vrcp.pop 4.0
        %v214 = vmul.f32 %v212, %v213
        %v215 = vsub.f32 %v204, %v214
        %v216 = vmul.f32 %v215, %v215
        %v217 = vsel %vm205, %v216, 0.0
        %v218 = vrot.slane %v217, 4
        %v219 = vadd.f32 %v217, %v218
        %v220 = vrot.slane %v219, 2
        %v221 = vadd.f32 %v219, %v220
        %v222 = vrot.slane %v221, 1
        %v223 = vadd.f32 %v221, %v222
        %v224 = vmul.f32 %v223, %v213
        %v225 = vadd.f32 %v224, 1e-06
        %v226 = vrsqrt.pop %v225
        %v227 = vld [vmem:[%s1] sm:$0xf]
        %v228 = vld [vmem:[%s2] sm:$0xf]
        %v229 = vmul.f32 %v215, %v226
        %231 = vset.pattern.permute.xlu0 0
        %232 = vperm.xlu0 %231, %v227
        %v233 = vpop.permute.xlu0 %232
        %v235 = vmul.f32 %v229, %v233
        %237 = vset.pattern.permute.xlu0 0
        %238 = vperm.xlu0 %237, %v228
        %v239 = vpop.permute.xlu0 %238
        %v241 = vadd.f32 %v235, %v239
        %242 = vst [vmem:[%s203] sm:$0xf] %v241
        %s243 = sand.u32 %s112, 1
        %s244 = scalar_lea.sflag [#allocation4], %s243
        %s245 = sand.u32 %s112, 1
        %s246 = smul.addr %s245, 4
        %s247 = scalar_lea.vmem [#allocation5], %s246
        // Predicated region
        $region37: #{tpu_custom_call.1} parent=31 // pred_check
          %p248 = pneg %p122
        $region38: #{tpu_custom_call.1} parent=31 // pred_check_branch
          %250 = sbr.rel (%p248) target = $region40
        $region39: #{tpu_custom_call.1} parent=31 // pred_region
          %s252 = ssub.s32 64, 64
          %253 = vsyncadd %s244, %s252
          %s254 = smul.addr %s24, 2
          %s255 = sadd.s32 %s25, %s254
          %s256 = smul.addr %s255, 64
          %s257 = scalar_lea.hbm %s3, %s256
          %s259 = sshll.u32 %s247, 4
          %s260 = int_to_ptr.vmem [resolvable:$true] %s259
          %262 = dma.vmem_to_hbm [thread:$0]  %s260, 64, %s257, %s244
        $region40: #{tpu_custom_call.1} parent=31 // pred_fallthru
          _
      $region32: #{tpu_custom_call.1} parent=5 // pred_fallthru
        _
      %p263 = scmp.le.s32.totalorder 2, %s15
      // Predicated region
      $region41: #{tpu_custom_call.1} parent=5 // pred_check
        %p264 = pneg %p263
      $region42: #{tpu_custom_call.1} parent=5 // pred_check_branch
        %266 = sbr.rel (%p264) target = $region44
      $region43: #{tpu_custom_call.1} parent=5 // pred_region
        %s267 = ssub.s32 %s15, 2
        // Predicated region
        $region45: #{tpu_custom_call.1} parent=43 // pred_check
          %p268 = pneg %p128
        $region46: #{tpu_custom_call.1} parent=43 // pred_check_branch
          %270 = sbr.rel (%p268) target = $region48
        $region47: #{tpu_custom_call.1} parent=43 // pred_region
          %s271 = sand.u32 %s113, 1
          %s272 = scalar_lea.sflag [#allocation4], %s271
          %s273 = sand.u32 %s113, 1
          %s274 = smul.addr %s273, 4
          %s275 = scalar_lea.vmem [#allocation5], %s274
          %276 = dma.done %s272, 64
        $region48: #{tpu_custom_call.1} parent=43 // pred_fallthru
          _
      $region44: #{tpu_custom_call.1} parent=5 // pred_fallthru
        _
    $region6: #{tpu_custom_call.1} parent=1 // loop_footer
      %s19 = sadd.s32 1, %s15
    $region7: #{tpu_custom_call.1} parent=1 // loop_footer_branch
      %14 = sbr.rel target = $region3
    $region8: #{tpu_custom_call.1} parent=1 // loop_exit
      _
    %277 = vsyncpa [#allocation3], 1
    %s278 = scalar_lea.sflag [#allocation3], 1
    %279 = vsyncpa %s278, 1
    %280 = vsyncpa [#allocation4], 1
    %s281 = scalar_lea.sflag [#allocation4], 1
    %282 = vsyncpa %s281, 1

</llo_original>
